<compile_context>
chip_gen: v7x
topology: tpu7x:2x2x1
jax: 0.10.0
libtpu: 0.0.40
codegen_flags: <defaults>
</compile_context>

<pallas_src>
import jax
import jax.numpy as jnp
from jax.experimental import pallas as pl
from jax.experimental.pallas import tpu as pltpu


def rgcn_kernel(x_ref, adj_ref, w_ref, o_ref):
    # x_ref:   (bb, N, d_in)       -- this step's batch-block of node features (f32)
    # adj_ref: (bb, E, N, N)       -- relational adjacency for the batch-block (bf16, 0/1)
    # w_ref:   (d_in, E * dp)      -- all edge-type weights, lane-dense, dp = pad(d_out, 128)
    # o_ref:   (bb, N, dp)         -- padded aggregated node embedding for the batch-block
    bb, N, d_in = x_ref.shape
    E = adj_ref.shape[1]
    dp = o_ref.shape[-1]

    # First contraction, fused over batch-block AND edge types: one MXU pass.
    x_flat = x_ref[...].reshape(bb * N, d_in)
    support_all = jnp.dot(x_flat, w_ref[...],
                          preferred_element_type=jnp.float32)        # (bb*N, E*dp)

    # adj is transported as bf16 (exact for 0/1) and widened once here; accumulation
    # stays f32 so the result matches the f32 reference to 1e-5.
    adj_all = adj_ref[...].astype(jnp.float32)                        # (bb, E, N, N)

    # Second contraction cannot fuse across E: the module applies ReLU per edge type
    # BEFORE the edge sum (relu-then-sum != sum-then-relu).  Static unroll (bb*E tiny).
    for b in range(bb):
        acc = jnp.zeros((N, dp), jnp.float32)
        for e in range(E):
            # Sublane offset b*N (multiple of 8) and lane offset e*dp (multiple of 128)
            # -> aligned, free view of the support tile.
            s_be = support_all[b * N:(b + 1) * N, e * dp:(e + 1) * dp]   # (N, dp)
            out_e = jnp.dot(adj_all[b, e], s_be,
                            preferred_element_type=jnp.float32)          # (N, dp)
            acc = acc + jnp.maximum(out_e, 0.0)     # ReLU per edge, then edge-sum
        o_ref[b] = acc.astype(o_ref.dtype)          # lane-dense (N, dp) store


def _num_tensorcores():
    """Best-effort local TensorCore count: 2 on v7x, 1 on v5e/v6e; safe fallback 1."""
    try:
        d = jax.devices()[0]
        for attr in ("num_cores", "core_count"):
            n = getattr(d, attr, None)
            if isinstance(n, int) and n > 0:
                return n
    except Exception:
        pass
    return 1


def relation_graph_convolution(x, adj, weight, num_parallel_blocks=None):
    """x: (B, N, d_in) f32, adj: (B, E, N, N) f32 (0/1), weight: (E, d_in, d_out) f32.
       Returns node_embedding: (B, N, d_out) f32 (aggregate='sum', ReLU, no bias)."""
    B, N, d_in = x.shape
    E = adj.shape[1]
    d_out = weight.shape[2]
    dp = pl.cdiv(d_out, 128) * 128          # lane-dense padded out width

    # Grid sizing: one parallel block per TensorCore (folds B completely on single-TC
    # v5e/v6e, keeps both v7x cores busy).  Override via num_parallel_blocks if desired.
    if num_parallel_blocks is None:
        num_parallel_blocks = max(1, min(B, _num_tensorcores()))
    while B % num_parallel_blocks != 0:       # keep even batch-blocks
        num_parallel_blocks -= 1
    bb = B // num_parallel_blocks

    # Pad each edge type's weight columns to a full 128-lane block and fuse into one
    # lane-dense (d_in, E*dp) operand.  Padded columns are exactly zero, so the extra
    # output lanes are zero after relu/sum and are sliced off after the kernel.
    w_pad = jnp.zeros((E, d_in, dp), weight.dtype).at[:, :, :d_out].set(weight)
    w2 = jnp.transpose(w_pad, (1, 0, 2)).reshape(d_in, E * dp)

    # adj is 0/1-valued -> bf16 cast is exact; halves the only E*N^2-sized DMA.
    adj_bf16 = adj.astype(jnp.bfloat16)

    flops = 2 * B * N * d_in * E * dp + 2 * B * E * N * N * dp
    bytes_accessed = x.size * 4 + adj_bf16.size * 2 + w2.size * 4 + B * N * dp * 4

    out_pad = pl.pallas_call(
        rgcn_kernel,
        out_shape=jax.ShapeDtypeStruct((B, N, dp), x.dtype),
        grid=(num_parallel_blocks,),
        in_specs=[
            pl.BlockSpec((bb, N, d_in), lambda i: (i, 0, 0)),        # x batch-block
            pl.BlockSpec((bb, E, N, N), lambda i: (i, 0, 0, 0)),     # adj batch-block
            pl.BlockSpec((d_in, E * dp), lambda i: (0, 0)),          # fused weights (resident)
        ],
        out_specs=pl.BlockSpec((bb, N, dp), lambda i: (i, 0, 0)),
        compiler_params=pltpu.CompilerParams(
            dimension_semantics=("parallel",)),
        cost_estimate=pl.CostEstimate(flops=flops, transcendentals=0,
                                      bytes_accessed=bytes_accessed),
    )(x, adj_bf16, w2)

    # Strip the lane padding outside the kernel (cheap XLA slice).
    return out_pad[:, :, :d_out]


def reference(x, adj, weight):
    support = jnp.einsum('bid,edh->beih', x, weight)
    output = jnp.einsum('beij,bejh->beih', adj, support)
    output = jax.nn.relu(output)          # ReLU before the edge-sum, as in the module
    return jnp.sum(output, axis=1)


if __name__ == "__main__":
    # Small deterministic shapes: batch=2, edge_dim=3, N=16 nodes, d_in=16, d_out=32.
    B, E, N, D_IN, D_OUT = 2, 3, 16, 16, 32
    key = jax.random.PRNGKey(0)
    kx, ka, kw = jax.random.split(key, 3)

    x = jax.random.normal(kx, (B, N, D_IN), dtype=jnp.float32)
    adj = (jax.random.uniform(ka, (B, E, N, N)) > 0.7).astype(jnp.float32)

    # Xavier-uniform init for weight (E, d_in, d_out), matching nn.init.xavier_uniform_
    # fan computation for 3-D tensors.
    fan_in = D_IN * D_OUT
    fan_out = E * D_OUT
    bound = (6.0 / (fan_in + fan_out)) ** 0.5
    weight = jax.random.uniform(kw, (E, D_IN, D_OUT), minval=-bound, maxval=bound,
                                dtype=jnp.float32)

    out = relation_graph_convolution(x, adj, weight)
    out = jax.block_until_ready(out)

    ref = reference(x, adj, weight)
    assert out.shape == (B, N, D_OUT)
    assert jnp.allclose(out, ref, atol=1e-5, rtol=1e-5)

    print("KERNEL_OK")
</pallas_src>

<mosaic_0001>
module attributes {stable_mosaic.version = 11 : i64} {
  func.func @rgcn_kernel(%arg0: i32, %arg1: memref<2x16x16xf32, #tpu.memory_space<vmem>>, %arg2: memref<2x3x16x16xbf16, #tpu.memory_space<vmem>>, %arg3: memref<16x384xf32, #tpu.memory_space<vmem>>, %arg4: memref<2x16x128xf32, #tpu.memory_space<vmem>>) attributes {dimension_semantics = [#tpu.dimension_semantics<parallel>], iteration_bounds = array<i64: 1>, scalar_prefetch = 0 : i64, scratch_operands = 0 : i64, tpu.core_type = #tpu.core_type<tc>, window_params = [{transform_indices = @transform_0, window_bounds = array<i64: 2, 16, 16>}, {transform_indices = @transform_1, window_bounds = array<i64: 2, 3, 16, 16>}, {pipeline_mode = #tpu.pipeline_mode<synchronous>, transform_indices = @transform_2, window_bounds = array<i64: 16, 384>}, {transform_indices = @transform_3, window_bounds = array<i64: 2, 16, 128>}]} {
    %c0 = arith.constant 0 : index
    %c0_0 = arith.constant 0 : index
    %c0_1 = arith.constant 0 : index
    %0 = vector.load %arg1[%c0, %c0_0, %c0_1] : memref<2x16x16xf32, #tpu.memory_space<vmem>>, vector<2x16x16xf32>
    %1 = vector.shape_cast %0 : vector<2x16x16xf32> to vector<32x16xf32>
    %c0_2 = arith.constant 0 : index
    %c0_3 = arith.constant 0 : index
    %2 = vector.load %arg3[%c0_2, %c0_3] : memref<16x384xf32, #tpu.memory_space<vmem>>, vector<16x384xf32>
    %cst = arith.constant dense<0.000000e+00> : vector<32x384xf32>
    %3 = tpu.matmul %1, %2, %cst {dimension_numbers = #tpu.dot_dimension_numbers<[1], [0], [0], [1], [0, 0, 1, 1], [], []>} : vector<32x16xf32>, vector<16x384xf32>, vector<32x384xf32> -> vector<32x384xf32>
    %c0_4 = arith.constant 0 : index
    %c0_5 = arith.constant 0 : index
    %c0_6 = arith.constant 0 : index
    %c0_7 = arith.constant 0 : index
    %4 = vector.load %arg2[%c0_4, %c0_5, %c0_6, %c0_7] : memref<2x3x16x16xbf16, #tpu.memory_space<vmem>>, vector<2x3x16x16xbf16>
    %5 = arith.extf %4 : vector<2x3x16x16xbf16> to vector<2x3x16x16xf32>
    %cst_8 = arith.constant 0.000000e+00 : f32
    %6 = vector.broadcast %cst_8 : f32 to vector<16x128xf32>
    %7 = vector.extract_strided_slice %3 {offsets = [0, 0], sizes = [16, 128], strides = [1, 1]} : vector<32x384xf32> to vector<16x128xf32>
    %8 = vector.extract_strided_slice %5 {offsets = [0, 0, 0, 0], sizes = [1, 1, 16, 16], strides = [1, 1, 1, 1]} : vector<2x3x16x16xf32> to vector<1x1x16x16xf32>
    %9 = vector.shape_cast %8 : vector<1x1x16x16xf32> to vector<16x16xf32>
    %cst_9 = arith.constant dense<0.000000e+00> : vector<16x128xf32>
    %10 = tpu.matmul %9, %7, %cst_9 {dimension_numbers = #tpu.dot_dimension_numbers<[1], [0], [0], [1], [0, 0, 1, 1], [], []>} : vector<16x16xf32>, vector<16x128xf32>, vector<16x128xf32> -> vector<16x128xf32>
    %cst_10 = arith.constant 0.000000e+00 : f32
    %11 = vector.broadcast %cst_10 : f32 to vector<16x128xf32>
    %12 = arith.maximumf %10, %11 : vector<16x128xf32>
    %13 = arith.addf %6, %12 : vector<16x128xf32>
    %14 = vector.extract_strided_slice %3 {offsets = [0, 128], sizes = [16, 128], strides = [1, 1]} : vector<32x384xf32> to vector<16x128xf32>
    %15 = vector.extract_strided_slice %5 {offsets = [0, 1, 0, 0], sizes = [1, 1, 16, 16], strides = [1, 1, 1, 1]} : vector<2x3x16x16xf32> to vector<1x1x16x16xf32>
    %16 = vector.shape_cast %15 : vector<1x1x16x16xf32> to vector<16x16xf32>
    %cst_11 = arith.constant dense<0.000000e+00> : vector<16x128xf32>
    %17 = tpu.matmul %16, %14, %cst_11 {dimension_numbers = #tpu.dot_dimension_numbers<[1], [0], [0], [1], [0, 0, 1, 1], [], []>} : vector<16x16xf32>, vector<16x128xf32>, vector<16x128xf32> -> vector<16x128xf32>
    %cst_12 = arith.constant 0.000000e+00 : f32
    %18 = vector.broadcast %cst_12 : f32 to vector<16x128xf32>
    %19 = arith.maximumf %17, %18 : vector<16x128xf32>
    %20 = arith.addf %13, %19 : vector<16x128xf32>
    %21 = vector.extract_strided_slice %3 {offsets = [0, 256], sizes = [16, 128], strides = [1, 1]} : vector<32x384xf32> to vector<16x128xf32>
    %22 = vector.extract_strided_slice %5 {offsets = [0, 2, 0, 0], sizes = [1, 1, 16, 16], strides = [1, 1, 1, 1]} : vector<2x3x16x16xf32> to vector<1x1x16x16xf32>
    %23 = vector.shape_cast %22 : vector<1x1x16x16xf32> to vector<16x16xf32>
    %cst_13 = arith.constant dense<0.000000e+00> : vector<16x128xf32>
    %24 = tpu.matmul %23, %21, %cst_13 {dimension_numbers = #tpu.dot_dimension_numbers<[1], [0], [0], [1], [0, 0, 1, 1], [], []>} : vector<16x16xf32>, vector<16x128xf32>, vector<16x128xf32> -> vector<16x128xf32>
    %cst_14 = arith.constant 0.000000e+00 : f32
    %25 = vector.broadcast %cst_14 : f32 to vector<16x128xf32>
    %26 = arith.maximumf %24, %25 : vector<16x128xf32>
    %27 = arith.addf %20, %26 : vector<16x128xf32>
    %c0_15 = arith.constant 0 : index
    %c0_16 = arith.constant 0 : index
    %c0_17 = arith.constant 0 : index
    %28 = vector.load %arg4[%c0_15, %c0_16, %c0_17] : memref<2x16x128xf32, #tpu.memory_space<vmem>>, vector<1x16x128xf32>
    %29 = vector.shape_cast %28 : vector<1x16x128xf32> to vector<16x128xf32>
    %30 = vector.shape_cast %27 : vector<16x128xf32> to vector<1x16x128xf32>
    tpu.vector_store %arg4[%c0_15, %c0_16, %c0_17], %30 {strides = array<i32>} : memref<2x16x128xf32, #tpu.memory_space<vmem>>, vector<1x16x128xf32>,
    %cst_18 = arith.constant 0.000000e+00 : f32
    %31 = vector.broadcast %cst_18 : f32 to vector<16x128xf32>
    %32 = vector.extract_strided_slice %3 {offsets = [16, 0], sizes = [16, 128], strides = [1, 1]} : vector<32x384xf32> to vector<16x128xf32>
    %33 = vector.extract_strided_slice %5 {offsets = [1, 0, 0, 0], sizes = [1, 1, 16, 16], strides = [1, 1, 1, 1]} : vector<2x3x16x16xf32> to vector<1x1x16x16xf32>
    %34 = vector.shape_cast %33 : vector<1x1x16x16xf32> to vector<16x16xf32>
    %cst_19 = arith.constant dense<0.000000e+00> : vector<16x128xf32>
    %35 = tpu.matmul %34, %32, %cst_19 {dimension_numbers = #tpu.dot_dimension_numbers<[1], [0], [0], [1], [0, 0, 1, 1], [], []>} : vector<16x16xf32>, vector<16x128xf32>, vector<16x128xf32> -> vector<16x128xf32>
    %cst_20 = arith.constant 0.000000e+00 : f32
    %36 = vector.broadcast %cst_20 : f32 to vector<16x128xf32>
    %37 = arith.maximumf %35, %36 : vector<16x128xf32>
    %38 = arith.addf %31, %37 : vector<16x128xf32>
    %39 = vector.extract_strided_slice %3 {offsets = [16, 128], sizes = [16, 128], strides = [1, 1]} : vector<32x384xf32> to vector<16x128xf32>
    %40 = vector.extract_strided_slice %5 {offsets = [1, 1, 0, 0], sizes = [1, 1, 16, 16], strides = [1, 1, 1, 1]} : vector<2x3x16x16xf32> to vector<1x1x16x16xf32>
    %41 = vector.shape_cast %40 : vector<1x1x16x16xf32> to vector<16x16xf32>
    %cst_21 = arith.constant dense<0.000000e+00> : vector<16x128xf32>
    %42 = tpu.matmul %41, %39, %cst_21 {dimension_numbers = #tpu.dot_dimension_numbers<[1], [0], [0], [1], [0, 0, 1, 1], [], []>} : vector<16x16xf32>, vector<16x128xf32>, vector<16x128xf32> -> vector<16x128xf32>
    %cst_22 = arith.constant 0.000000e+00 : f32
    %43 = vector.broadcast %cst_22 : f32 to vector<16x128xf32>
    %44 = arith.maximumf %42, %43 : vector<16x128xf32>
    %45 = arith.addf %38, %44 : vector<16x128xf32>
    %46 = vector.extract_strided_slice %3 {offsets = [16, 256], sizes = [16, 128], strides = [1, 1]} : vector<32x384xf32> to vector<16x128xf32>
    %47 = vector.extract_strided_slice %5 {offsets = [1, 2, 0, 0], sizes = [1, 1, 16, 16], strides = [1, 1, 1, 1]} : vector<2x3x16x16xf32> to vector<1x1x16x16xf32>
    %48 = vector.shape_cast %47 : vector<1x1x16x16xf32> to vector<16x16xf32>
    %cst_23 = arith.constant dense<0.000000e+00> : vector<16x128xf32>
    %49 = tpu.matmul %48, %46, %cst_23 {dimension_numbers = #tpu.dot_dimension_numbers<[1], [0], [0], [1], [0, 0, 1, 1], [], []>} : vector<16x16xf32>, vector<16x128xf32>, vector<16x128xf32> -> vector<16x128xf32>
    %cst_24 = arith.constant 0.000000e+00 : f32
    %50 = vector.broadcast %cst_24 : f32 to vector<16x128xf32>
    %51 = arith.maximumf %49, %50 : vector<16x128xf32>
    %52 = arith.addf %45, %51 : vector<16x128xf32>
    %c1 = arith.constant 1 : index
    %c0_25 = arith.constant 0 : index
    %c0_26 = arith.constant 0 : index
    %53 = vector.load %arg4[%c1, %c0_25, %c0_26] : memref<2x16x128xf32, #tpu.memory_space<vmem>>, vector<1x16x128xf32>
    %54 = vector.shape_cast %53 : vector<1x16x128xf32> to vector<16x128xf32>
    %55 = vector.shape_cast %52 : vector<16x128xf32> to vector<1x16x128xf32>
    tpu.vector_store %arg4[%c1, %c0_25, %c0_26], %55 {strides = array<i32>} : memref<2x16x128xf32, #tpu.memory_space<vmem>>, vector<1x16x128xf32>,
    return
  }
  func.func @transform_0(%arg0: i32) -> (i32, i32, i32) {
    %c0_i32 = arith.constant 0 : i32
    %c0_i32_0 = arith.constant 0 : i32
    %c0_i32_1 = arith.constant 0 : i32
    return %arg0, %c0_i32, %c0_i32_0 : i32, i32, i32
  }
  func.func @transform_1(%arg0: i32) -> (i32, i32, i32, i32) {
    %c0_i32 = arith.constant 0 : i32
    %c0_i32_0 = arith.constant 0 : i32
    %c0_i32_1 = arith.constant 0 : i32
    %c0_i32_2 = arith.constant 0 : i32
    return %arg0, %c0_i32, %c0_i32_0, %c0_i32_1 : i32, i32, i32, i32
  }
  func.func @transform_2(%arg0: i32) -> (i32, i32) {
    %c0_i32 = arith.constant 0 : i32
    %c0_i32_0 = arith.constant 0 : i32
    %c0_i32_1 = arith.constant 0 : i32
    return %c0_i32, %c0_i32_0 : i32, i32
  }
  func.func @transform_3(%arg0: i32) -> (i32, i32, i32) {
    %c0_i32 = arith.constant 0 : i32
    %c0_i32_0 = arith.constant 0 : i32
    %c0_i32_1 = arith.constant 0 : i32
    return %arg0, %c0_i32, %c0_i32_0 : i32, i32, i32
  }
}

</mosaic_0001>

<llo_original>
// kernel: tpu_custom_call.1
$region0: #{tpu_custom_call.1}
  #allocation0 [shape = 'u32[]', space=smem, size = 0x4, offset = 0x4, fixed_abs, tag = 'smem constant byte address 0x4 - core index']
  #allocation1 [shape = 'u32[144,128]{1,0:T(1,128)}', space=vmem, size = 0x12000, scoped, tag = 'internal scratch']
  %s0 = inlined_call_operand.hbm [shape: f32[2,16,16], index: 0, kind: input, shape index: {}]
  %s1 = inlined_call_operand.hbm [shape: bf16[2,3,16,16], index: 1, kind: input, shape index: {}]
  %s2 = inlined_call_operand.hbm [shape: f32[16,384], index: 2, kind: input, shape index: {}]
  %s3 = inlined_call_operand.hbm [shape: f32[2,16,128], index: 3, kind: output, shape index: {}]
  %s4 = sld [smem:[#allocation0]]
  $region34: #{tpu_custom_call.1} parent=0
    _
  %s6 = ssub.s32 1, %s4
  %s7 = scalar_select 0, %s6, %s4
  $region1: #{tpu_custom_call.1} parent=0
    #allocation2 [shape = 'u8[16384]{0}', space=vmem, size = 0x4000, scoped, tag = 'input window, operand 0, single buffered']
    #allocation3 [shape = 's32[1]{0}', space=sflag, size = 0x4, scoped, tag = 'scoped memory for tpu_custom_call.1']
    #allocation4 [shape = 's32[1]{0}', space=sflag, size = 0x4, scoped, tag = 'scoped memory for tpu_custom_call.1']
    #allocation5 [shape = 'u8[24576]{0}', space=vmem, size = 0x6000, scoped, tag = 'input window, operand 1, single buffered']
    #allocation6 [shape = 's32[1]{0}', space=sflag, size = 0x4, scoped, tag = 'scoped memory for tpu_custom_call.1']
    #allocation7 [shape = 'u8[24576]{0}', space=vmem, size = 0x6000, scoped, tag = 'input window, operand 2, single buffered']
    #allocation8 [shape = 'u8[16384]{0}', space=vmem, size = 0x4000, scoped, tag = 'output window, operand 0, single buffered']
    %8 = vsyncpa [#allocation3], 0
    %9 = vsyncpa [#allocation6], 0
    %10 = vsyncpa [#allocation4], 0
    // Predicated region
    $region2: #{tpu_custom_call.1} parent=1 // pred_check
      _
    $region3: #{tpu_custom_call.1} parent=1 // pred_check_branch
      %12 = sbr.rel (0) target = $region5
    $region4: #{tpu_custom_call.1} parent=1 // pred_region
      %s14 = ssub.s32 512, 512
      %15 = vsyncadd [#allocation3], %s14
      %s16 = sshll.u32 [#allocation2], 4
      %s17 = int_to_ptr.vmem [resolvable:$true] %s16
      %22 = dma.hbm_to_vmem [thread:$0]  %s0, 512, %s17, [#allocation3], 128, 128, 8
    $region5: #{tpu_custom_call.1} parent=1 // pred_fallthru
      _
    // Predicated region
    $region6: #{tpu_custom_call.1} parent=1 // pred_check
      _
    $region7: #{tpu_custom_call.1} parent=1 // pred_check_branch
      %24 = sbr.rel (0) target = $region9
    $region8: #{tpu_custom_call.1} parent=1 // pred_region
      %s26 = ssub.s32 768, 768
      %27 = vsyncadd [#allocation6], %s26
      %s28 = sshll.u32 [#allocation5], 4
      %s29 = int_to_ptr.vmem [resolvable:$true] %s28
      %34 = dma.hbm_to_vmem [thread:$0]  %s1, 768, %s29, [#allocation6], 64, 64, 4
    $region9: #{tpu_custom_call.1} parent=1 // pred_fallthru
      _
    // Predicated region
    $region10: #{tpu_custom_call.1} parent=1 // pred_check
      _
    $region11: #{tpu_custom_call.1} parent=1 // pred_check_branch
      %36 = sbr.rel (0) target = $region13
    $region12: #{tpu_custom_call.1} parent=1 // pred_region
      %s38 = ssub.s32 768, 768
      %39 = vsyncadd [#allocation6], %s38
      %s40 = sshll.u32 [#allocation7], 4
      %s41 = int_to_ptr.vmem [resolvable:$true] %s40
      %46 = dma.hbm_to_vmem [thread:$0]  %s2, 768, %s41, [#allocation6], 384, 384, 24
    $region13: #{tpu_custom_call.1} parent=1 // pred_fallthru
      _
    // Predicated region
    $region14: #{tpu_custom_call.1} parent=1 // pred_check
      _
    $region15: #{tpu_custom_call.1} parent=1 // pred_check_branch
      %48 = sbr.rel (0) target = $region17
    $region16: #{tpu_custom_call.1} parent=1 // pred_region
      %49 = dma.done [#allocation3], 512
    $region17: #{tpu_custom_call.1} parent=1 // pred_fallthru
      _
    // Predicated region
    $region18: #{tpu_custom_call.1} parent=1 // pred_check
      _
    $region19: #{tpu_custom_call.1} parent=1 // pred_check_branch
      %51 = sbr.rel (0) target = $region21
    $region20: #{tpu_custom_call.1} parent=1 // pred_region
      %52 = dma.done [#allocation6], 768
    $region21: #{tpu_custom_call.1} parent=1 // pred_fallthru
      _
    // Predicated region
    $region22: #{tpu_custom_call.1} parent=1 // pred_check
      _
    $region23: #{tpu_custom_call.1} parent=1 // pred_check_branch
      %54 = sbr.rel (0) target = $region25
    $region24: #{tpu_custom_call.1} parent=1 // pred_region
      %55 = dma.done [#allocation6], 768
    $region25: #{tpu_custom_call.1} parent=1 // pred_fallthru
      _
    %v56 = vld [vmem:[#allocation2] sm:$0xff]
    %v57 = vld [vmem:[#allocation2 + $0x8] sm:$0xff]
    %v58 = vld [vmem:[#allocation2 + $0x10] sm:$0xff]
    %v59 = vld [vmem:[#allocation2 + $0x18] sm:$0xff]
    %v60 = vld [vmem:[#allocation7] sm:$0xff]
    %v61 = vld [vmem:[#allocation7 + $0x8] sm:$0xff]
    %v62 = vld [vmem:[#allocation7 + $0x10] sm:$0xff]
    %v63 = vld [vmem:[#allocation7 + $0x18] sm:$0xff]
    %v64 = vld [vmem:[#allocation7 + $0x20] sm:$0xff]
    %v65 = vld [vmem:[#allocation7 + $0x28] sm:$0xff]
    %vm66 = vcmask 130048
    %v68 = vsel %vm66, %v56, 0
    %v71 = vsel %vm66, %v57, 0
    %v74 = vsel %vm66, %v58, 0
    %v77 = vsel %vm66, %v59, 0
    %79 = vmatprep.subr.mxu0 %v61
    %80 = vmatpush1.msra.mxu0 %v60
    %81 = vmatprep.subr.mxu0 %v64
    %82 = vmatpush1.msra.mxu0 %v63
    %83 = vmatprep.subr.mxu0 0.0
    %84 = vmatpush1.msra.mxu0 0.0
    %85 = vmatprep.subr.mxu0 0.0
    %86 = vmatpush1.msra.mxu0 0.0
    %87 = vmatprep.subr.mxu0 0.0
    %88 = vmatpush1.msra.mxu0 0.0
    %89 = vmatprep.subr.mxu0 0.0
    %90 = vmatpush1.msra.mxu0 0.0
    %91 = vmatprep.subr.mxu0 0.0
    %92 = vmatpush1.msra.mxu0 0.0
    %93 = vmatprep.subr.mxu0 0.0
    %94 = vmatpush1.msra.mxu0 0.0
    %95 = vmatprep.subr.mxu0 0.0
    %96 = vmatpush1.msra.mxu0 0.0
    %97 = vmatprep.subr.mxu0 0.0
    %98 = vmatpush1.msra.mxu0 0.0
    %99 = vmatprep.subr.mxu0 0.0
    %100 = vmatpush1.msra.mxu0 0.0
    %101 = vmatprep.subr.mxu0 0.0
    %102 = vmatpush1.msra.mxu0 0.0
    %103 = vmatprep.subr.mxu0 0.0
    %104 = vmatpush1.msra.mxu0 0.0
    %105 = vmatprep.subr.mxu0 0.0
    %106 = vmatpush1.msra.mxu0 0.0
    %107 = vmatprep.subr.mxu0 0.0
    %108 = vmatpush1.msra.mxu0 0.0
    %109 = vmatprep.subr.mxu0 0.0
    %110 = vmatpush1.msra.mxu0 0.0
    %111 = vmatprep.subr.mxu0 0.0
    %112 = vmatpush1.msra.mxu0 0.0
    %113 = vmatprep.subr.mxu0 0.0
    %114 = vmatpush1.msra.mxu0 0.0
    %115 = vmatprep.subr.mxu0 0.0
    %116 = vmatpush1.msra.mxu0 0.0
    %117 = vmatprep.subr.mxu0 0.0
    %118 = vmatpush1.msra.mxu0 0.0
    %119 = vmatprep.subr.mxu0 0.0
    %120 = vmatpush1.msra.mxu0 0.0
    %121 = vmatprep.subr.mxu0 0.0
    %122 = vmatpush1.msra.mxu0 0.0
    %123 = vmatprep.subr.mxu0 0.0
    %124 = vmatpush1.msra.mxu0 0.0
    %125 = vmatprep.subr.mxu0 0.0
    %126 = vmatpush1.msra.mxu0 0.0
    %127 = vmatprep.subr.mxu0 0.0
    %128 = vmatpush1.msra.mxu0 0.0
    %129 = vmatprep.subr.mxu0 0.0
    %130 = vmatpush1.msra.mxu0 0.0
    %131 = vmatprep.subr.mxu0 0.0
    %132 = vmatpush1.msra.mxu0 0.0
    %133 = vmatprep.subr.mxu0 0.0
    %134 = vmatpush1.msra.mxu0 0.0
    %135 = vmatprep.subr.mxu0 0.0
    %136 = vmatpush1.msra.mxu0 0.0
    %137 = vmatprep.subr.mxu0 0.0
    %138 = vmatpush1.msra.mxu0 0.0
    %139 = vmatprep.subr.mxu0 0.0
    %140 = vmatpush1.msra.mxu0 0.0
    %141 = vmatprep.subr.mxu0 0.0
    %142 = vmatpush1.msra.mxu0 0.0
    %143 = vmatprep.mubr.f32.mxu0 0.0
    %144 = vmatmul.mubr.f32.gmra.mrb[0].mxu0 %v68
    %v145 = vpop.f32.mrb[0].mxu0
    %v146 = vadd.f32 0.0, %v145
    %v147 = vpop.f32.mrb[0].mxu0
    %v148 = vadd.f32 0.0, %v147
    %149 = vmatprep.mubr.f32.mxu0 0.0
    %150 = vmatmul.mubr.f32.gmra.mrb[0].mxu0 %v71
    %v151 = vpop.f32.mrb[0].mxu0
    %v152 = vadd.f32 0.0, %v151
    %v153 = vpop.f32.mrb[0].mxu0
    %v154 = vadd.f32 0.0, %v153
    %155 = vmatprep.mubr.f32.mxu0 0.0
    %156 = vmatmul.mubr.f32.gmra.mrb[0].mxu0 %v74
    %v157 = vpop.f32.mrb[0].mxu0
    %v158 = vadd.f32 0.0, %v157
    %v159 = vpop.f32.mrb[0].mxu0
    %v160 = vadd.f32 0.0, %v159
    %161 = vmatprep.mubr.f32.mxu0 0.0
    %162 = vmatmul.mubr.f32.gmra.mrb[0].mxu0 %v77
    %v163 = vpop.f32.mrb[0].mxu0
    %v164 = vadd.f32 0.0, %v163
    %v165 = vpop.f32.mrb[0].mxu0
    %v166 = vadd.f32 0.0, %v165
    %167 = vdwg.mxu0
    %168 = vmatprep.subr.mxu0 0.0
    %169 = vmatpush1.msra.mxu0 %v62
    %170 = vmatprep.subr.mxu0 0.0
    %171 = vmatpush1.msra.mxu0 %v65
    %172 = vmatprep.subr.mxu0 0.0
    %173 = vmatpush1.msra.mxu0 0.0
    %174 = vmatprep.subr.mxu0 0.0
    %175 = vmatpush1.msra.mxu0 0.0
    %176 = vmatprep.subr.mxu0 0.0
    %177 = vmatpush1.msra.mxu0 0.0
    %178 = vmatprep.subr.mxu0 0.0
    %179 = vmatpush1.msra.mxu0 0.0
    %180 = vmatprep.subr.mxu0 0.0
    %181 = vmatpush1.msra.mxu0 0.0
    %182 = vmatprep.subr.mxu0 0.0
    %183 = vmatpush1.msra.mxu0 0.0
    %184 = vmatprep.subr.mxu0 0.0
    %185 = vmatpush1.msra.mxu0 0.0
    %186 = vmatprep.subr.mxu0 0.0
    %187 = vmatpush1.msra.mxu0 0.0
    %188 = vmatprep.subr.mxu0 0.0
    %189 = vmatpush1.msra.mxu0 0.0
    %190 = vmatprep.subr.mxu0 0.0
    %191 = vmatpush1.msra.mxu0 0.0
    %192 = vmatprep.subr.mxu0 0.0
    %193 = vmatpush1.msra.mxu0 0.0
    %194 = vmatprep.subr.mxu0 0.0
    %195 = vmatpush1.msra.mxu0 0.0
    %196 = vmatprep.subr.mxu0 0.0
    %197 = vmatpush1.msra.mxu0 0.0
    %198 = vmatprep.subr.mxu0 0.0
    %199 = vmatpush1.msra.mxu0 0.0
    %200 = vmatprep.subr.mxu0 0.0
    %201 = vmatpush1.msra.mxu0 0.0
    %202 = vmatprep.subr.mxu0 0.0
    %203 = vmatpush1.msra.mxu0 0.0
    %204 = vmatprep.subr.mxu0 0.0
    %205 = vmatpush1.msra.mxu0 0.0
    %206 = vmatprep.subr.mxu0 0.0
    %207 = vmatpush1.msra.mxu0 0.0
    %208 = vmatprep.subr.mxu0 0.0
    %209 = vmatpush1.msra.mxu0 0.0
    %210 = vmatprep.subr.mxu0 0.0
    %211 = vmatpush1.msra.mxu0 0.0
    %212 = vmatprep.subr.mxu0 0.0
    %213 = vmatpush1.msra.mxu0 0.0
    %214 = vmatprep.subr.mxu0 0.0
    %215 = vmatpush1.msra.mxu0 0.0
    %216 = vmatprep.subr.mxu0 0.0
    %217 = vmatpush1.msra.mxu0 0.0
    %218 = vmatprep.subr.mxu0 0.0
    %219 = vmatpush1.msra.mxu0 0.0
    %220 = vmatprep.subr.mxu0 0.0
    %221 = vmatpush1.msra.mxu0 0.0
    %222 = vmatprep.subr.mxu0 0.0
    %223 = vmatpush1.msra.mxu0 0.0
    %224 = vmatprep.subr.mxu0 0.0
    %225 = vmatpush1.msra.mxu0 0.0
    %226 = vmatprep.subr.mxu0 0.0
    %227 = vmatpush1.msra.mxu0 0.0
    %228 = vmatprep.subr.mxu0 0.0
    %229 = vmatpush1.msra.mxu0 0.0
    %230 = vmatprep.subr.mxu0 0.0
    %231 = vmatpush1.msra.mxu0 0.0
    %232 = vmatprep.mubr.f32.mxu0 0.0
    %233 = vmatmul.mubr.f32.gmra.mrb[0].mxu0 %v68
    %v234 = vpop.f32.mrb[0].mxu0
    %v235 = vadd.f32 0.0, %v234
    %v236 = vpop.f32.mrb[0].mxu0
    %237 = vmatprep.mubr.f32.mxu0 0.0
    %238 = vmatmul.mubr.f32.gmra.mrb[0].mxu0 %v71
    %v239 = vpop.f32.mrb[0].mxu0
    %v240 = vadd.f32 0.0, %v239
    %v241 = vpop.f32.mrb[0].mxu0
    %242 = vmatprep.mubr.f32.mxu0 0.0
    %243 = vmatmul.mubr.f32.gmra.mrb[0].mxu0 %v74
    %v244 = vpop.f32.mrb[0].mxu0
    %v245 = vadd.f32 0.0, %v244
    %v246 = vpop.f32.mrb[0].mxu0
    %247 = vmatprep.mubr.f32.mxu0 0.0
    %248 = vmatmul.mubr.f32.gmra.mrb[0].mxu0 %v77
    %v249 = vpop.f32.mrb[0].mxu0
    %v250 = vadd.f32 0.0, %v249
    %v251 = vpop.f32.mrb[0].mxu0
    %252 = vdwg.mxu0
    %v253 = vld [vmem:[#allocation5] sm:$0xf]
    %v254 = vld [vmem:[#allocation5 + $0x4] sm:$0xf]
    %v255 = vld [vmem:[#allocation5 + $0x8] sm:$0xf]
    %v256 = vld [vmem:[#allocation5 + $0xc] sm:$0xf]
    %v257 = vld [vmem:[#allocation5 + $0x10] sm:$0xf]
    %v258 = vld [vmem:[#allocation5 + $0x14] sm:$0xf]
    %v259 = vld [vmem:[#allocation5 + $0x18] sm:$0xf]
    %v260 = vld [vmem:[#allocation5 + $0x1c] sm:$0xf]
    %v261 = vld [vmem:[#allocation5 + $0x20] sm:$0xf]
    %v262 = vld [vmem:[#allocation5 + $0x24] sm:$0xf]
    %v263 = vld [vmem:[#allocation5 + $0x28] sm:$0xf]
    %v264 = vld [vmem:[#allocation5 + $0x2c] sm:$0xf]
    %v265 = vunpack.c.l.bf16 %v253
    %v266 = vunpack.c.l.bf16 %v254
    %v267 = vunpack.c.l.bf16 %v255
    %v268 = vunpack.c.l.bf16 %v256
    %v269 = vunpack.c.l.bf16 %v257
    %v270 = vunpack.c.l.bf16 %v258
    %v271 = vunpack.c.l.bf16 %v259
    %v272 = vunpack.c.l.bf16 %v260
    %v273 = vunpack.c.l.bf16 %v261
    %v274 = vunpack.c.l.bf16 %v262
    %v275 = vunpack.c.l.bf16 %v263
    %v276 = vunpack.c.l.bf16 %v264
    %v278 = vsel %vm66, %v265, 0
    %v281 = vsel %vm66, %v266, 0
    %283 = vmatprep.subr.mxu0 0.0
    %284 = vmatpush1.msra.mxu0 %v146
    %285 = vmatprep.subr.mxu0 0.0
    %286 = vmatpush1.msra.mxu0 %v152
    %287 = vmatprep.subr.mxu0 0.0
    %288 = vmatpush1.msra.mxu0 0.0
    %289 = vmatprep.subr.mxu0 0.0
    %290 = vmatpush1.msra.mxu0 0.0
    %291 = vmatprep.subr.mxu0 0.0
    %292 = vmatpush1.msra.mxu0 0.0
    %293 = vmatprep.subr.mxu0 0.0
    %294 = vmatpush1.msra.mxu0 0.0
    %295 = vmatprep.subr.mxu0 0.0
    %296 = vmatpush1.msra.mxu0 0.0
    %297 = vmatprep.subr.mxu0 0.0
    %298 = vmatpush1.msra.mxu0 0.0
    %299 = vmatprep.subr.mxu0 0.0
    %300 = vmatpush1.msra.mxu0 0.0
    %301 = vmatprep.subr.mxu0 0.0
    %302 = vmatpush1.msra.mxu0 0.0
    %303 = vmatprep.subr.mxu0 0.0
    %304 = vmatpush1.msra.mxu0 0.0
    %305 = vmatprep.subr.mxu0 0.0
    %306 = vmatpush1.msra.mxu0 0.0
    %307 = vmatprep.subr.mxu0 0.0
    %308 = vmatpush1.msra.mxu0 0.0
    %309 = vmatprep.subr.mxu0 0.0
    %310 = vmatpush1.msra.mxu0 0.0
    %311 = vmatprep.subr.mxu0 0.0
    %312 = vmatpush1.msra.mxu0 0.0
    %313 = vmatprep.subr.mxu0 0.0
    %314 = vmatpush1.msra.mxu0 0.0
    %315 = vmatprep.subr.mxu0 0.0
    %316 = vmatpush1.msra.mxu0 0.0
    %317 = vmatprep.subr.mxu0 0.0
    %318 = vmatpush1.msra.mxu0 0.0
    %319 = vmatprep.subr.mxu0 0.0
    %320 = vmatpush1.msra.mxu0 0.0
    %321 = vmatprep.subr.mxu0 0.0
    %322 = vmatpush1.msra.mxu0 0.0
    %323 = vmatprep.subr.mxu0 0.0
    %324 = vmatpush1.msra.mxu0 0.0
    %325 = vmatprep.subr.mxu0 0.0
    %326 = vmatpush1.msra.mxu0 0.0
    %327 = vmatprep.subr.mxu0 0.0
    %328 = vmatpush1.msra.mxu0 0.0
    %329 = vmatprep.subr.mxu0 0.0
    %330 = vmatpush1.msra.mxu0 0.0
    %331 = vmatprep.subr.mxu0 0.0
    %332 = vmatpush1.msra.mxu0 0.0
    %333 = vmatprep.subr.mxu0 0.0
    %334 = vmatpush1.msra.mxu0 0.0
    %335 = vmatprep.subr.mxu0 0.0
    %336 = vmatpush1.msra.mxu0 0.0
    %337 = vmatprep.subr.mxu0 0.0
    %338 = vmatpush1.msra.mxu0 0.0
    %339 = vmatprep.subr.mxu0 0.0
    %340 = vmatpush1.msra.mxu0 0.0
    %341 = vmatprep.subr.mxu0 0.0
    %342 = vmatpush1.msra.mxu0 0.0
    %343 = vmatprep.subr.mxu0 0.0
    %344 = vmatpush1.msra.mxu0 0.0
    %345 = vmatprep.subr.mxu0 0.0
    %346 = vmatpush1.msra.mxu0 0.0
    %347 = vmatprep.mubr.f32.mxu0 0.0
    %348 = vmatmul.mubr.f32.gmra.mrb[0].mxu0 %v278
    %v349 = vpop.f32.mrb[0].mxu0
    %v350 = vadd.f32 0.0, %v349
    %v351 = vpop.f32.mrb[0].mxu0
    %352 = vmatprep.mubr.f32.mxu0 0.0
    %353 = vmatmul.mubr.f32.gmra.mrb[0].mxu0 %v281
    %v354 = vpop.f32.mrb[0].mxu0
    %v355 = vadd.f32 0.0, %v354
    %v356 = vpop.f32.mrb[0].mxu0
    %357 = vdwg.mxu0
    %v358 = vmax.f32 %v350, 0.0
    %v359 = vmax.f32 %v355, 0.0
    %v360 = vadd.f32 %v358, 0.0
    %v361 = vadd.f32 %v359, 0.0
    %v363 = vsel %vm66, %v267, 0
    %v366 = vsel %vm66, %v268, 0
    %368 = vmatprep.subr.mxu0 0.0
    %369 = vmatpush1.msra.mxu0 %v148
    %370 = vmatprep.subr.mxu0 0.0
    %371 = vmatpush1.msra.mxu0 %v154
    %372 = vmatprep.subr.mxu0 0.0
    %373 = vmatpush1.msra.mxu0 0.0
    %374 = vmatprep.subr.mxu0 0.0
    %375 = vmatpush1.msra.mxu0 0.0
    %376 = vmatprep.subr.mxu0 0.0
    %377 = vmatpush1.msra.mxu0 0.0
    %378 = vmatprep.subr.mxu0 0.0
    %379 = vmatpush1.msra.mxu0 0.0
    %380 = vmatprep.subr.mxu0 0.0
    %381 = vmatpush1.msra.mxu0 0.0
    %382 = vmatprep.subr.mxu0 0.0
    %383 = vmatpush1.msra.mxu0 0.0
    %384 = vmatprep.subr.mxu0 0.0
    %385 = vmatpush1.msra.mxu0 0.0
    %386 = vmatprep.subr.mxu0 0.0
    %387 = vmatpush1.msra.mxu0 0.0
    %388 = vmatprep.subr.mxu0 0.0
    %389 = vmatpush1.msra.mxu0 0.0
    %390 = vmatprep.subr.mxu0 0.0
    %391 = vmatpush1.msra.mxu0 0.0
    %392 = vmatprep.subr.mxu0 0.0
    %393 = vmatpush1.msra.mxu0 0.0
    %394 = vmatprep.subr.mxu0 0.0
    %395 = vmatpush1.msra.mxu0 0.0
    %396 = vmatprep.subr.mxu0 0.0
    %397 = vmatpush1.msra.mxu0 0.0
    %398 = vmatprep.subr.mxu0 0.0
    %399 = vmatpush1.msra.mxu0 0.0
    %400 = vmatprep.subr.mxu0 0.0
    %401 = vmatpush1.msra.mxu0 0.0
    %402 = vmatprep.subr.mxu0 0.0
    %403 = vmatpush1.msra.mxu0 0.0
    %404 = vmatprep.subr.mxu0 0.0
    %405 = vmatpush1.msra.mxu0 0.0
    %406 = vmatprep.subr.mxu0 0.0
    %407 = vmatpush1.msra.mxu0 0.0
    %408 = vmatprep.subr.mxu0 0.0
    %409 = vmatpush1.msra.mxu0 0.0
    %410 = vmatprep.subr.mxu0 0.0
    %411 = vmatpush1.msra.mxu0 0.0
    %412 = vmatprep.subr.mxu0 0.0
    %413 = vmatpush1.msra.mxu0 0.0
    %414 = vmatprep.subr.mxu0 0.0
    %415 = vmatpush1.msra.mxu0 0.0
    %416 = vmatprep.subr.mxu0 0.0
    %417 = vmatpush1.msra.mxu0 0.0
    %418 = vmatprep.subr.mxu0 0.0
    %419 = vmatpush1.msra.mxu0 0.0
    %420 = vmatprep.subr.mxu0 0.0
    %421 = vmatpush1.msra.mxu0 0.0
    %422 = vmatprep.subr.mxu0 0.0
    %423 = vmatpush1.msra.mxu0 0.0
    %424 = vmatprep.subr.mxu0 0.0
    %425 = vmatpush1.msra.mxu0 0.0
    %426 = vmatprep.subr.mxu0 0.0
    %427 = vmatpush1.msra.mxu0 0.0
    %428 = vmatprep.subr.mxu0 0.0
    %429 = vmatpush1.msra.mxu0 0.0
    %430 = vmatprep.subr.mxu0 0.0
    %431 = vmatpush1.msra.mxu0 0.0
    %432 = vmatprep.mubr.f32.mxu0 0.0
    %433 = vmatmul.mubr.f32.gmra.mrb[0].mxu0 %v363
    %v434 = vpop.f32.mrb[0].mxu0
    %v435 = vadd.f32 0.0, %v434
    %v436 = vpop.f32.mrb[0].mxu0
    %437 = vmatprep.mubr.f32.mxu0 0.0
    %438 = vmatmul.mubr.f32.gmra.mrb[0].mxu0 %v366
    %v439 = vpop.f32.mrb[0].mxu0
    %v440 = vadd.f32 0.0, %v439
    %v441 = vpop.f32.mrb[0].mxu0
    %442 = vdwg.mxu0
    %v443 = vmax.f32 %v435, 0.0
    %v444 = vmax.f32 %v440, 0.0
    %v445 = vadd.f32 %v360, %v443
    %v446 = vadd.f32 %v361, %v444
    %v448 = vsel %vm66, %v269, 0
    %v451 = vsel %vm66, %v270, 0
    %453 = vmatprep.subr.mxu0 0.0
    %454 = vmatpush1.msra.mxu0 %v235
    %455 = vmatprep.subr.mxu0 0.0
    %456 = vmatpush1.msra.mxu0 %v240
    %457 = vmatprep.subr.mxu0 0.0
    %458 = vmatpush1.msra.mxu0 0.0
    %459 = vmatprep.subr.mxu0 0.0
    %460 = vmatpush1.msra.mxu0 0.0
    %461 = vmatprep.subr.mxu0 0.0
    %462 = vmatpush1.msra.mxu0 0.0
    %463 = vmatprep.subr.mxu0 0.0
    %464 = vmatpush1.msra.mxu0 0.0
    %465 = vmatprep.subr.mxu0 0.0
    %466 = vmatpush1.msra.mxu0 0.0
    %467 = vmatprep.subr.mxu0 0.0
    %468 = vmatpush1.msra.mxu0 0.0
    %469 = vmatprep.subr.mxu0 0.0
    %470 = vmatpush1.msra.mxu0 0.0
    %471 = vmatprep.subr.mxu0 0.0
    %472 = vmatpush1.msra.mxu0 0.0
    %473 = vmatprep.subr.mxu0 0.0
    %474 = vmatpush1.msra.mxu0 0.0
    %475 = vmatprep.subr.mxu0 0.0
    %476 = vmatpush1.msra.mxu0 0.0
    %477 = vmatprep.subr.mxu0 0.0
    %478 = vmatpush1.msra.mxu0 0.0
    %479 = vmatprep.subr.mxu0 0.0
    %480 = vmatpush1.msra.mxu0 0.0
    %481 = vmatprep.subr.mxu0 0.0
    %482 = vmatpush1.msra.mxu0 0.0
    %483 = vmatprep.subr.mxu0 0.0
    %484 = vmatpush1.msra.mxu0 0.0
    %485 = vmatprep.subr.mxu0 0.0
    %486 = vmatpush1.msra.mxu0 0.0
    %487 = vmatprep.subr.mxu0 0.0
    %488 = vmatpush1.msra.mxu0 0.0
    %489 = vmatprep.subr.mxu0 0.0
    %490 = vmatpush1.msra.mxu0 0.0
    %491 = vmatprep.subr.mxu0 0.0
    %492 = vmatpush1.msra.mxu0 0.0
    %493 = vmatprep.subr.mxu0 0.0
    %494 = vmatpush1.msra.mxu0 0.0
    %495 = vmatprep.subr.mxu0 0.0
    %496 = vmatpush1.msra.mxu0 0.0
    %497 = vmatprep.subr.mxu0 0.0
    %498 = vmatpush1.msra.mxu0 0.0
    %499 = vmatprep.subr.mxu0 0.0
    %500 = vmatpush1.msra.mxu0 0.0
    %501 = vmatprep.subr.mxu0 0.0
    %502 = vmatpush1.msra.mxu0 0.0
    %503 = vmatprep.subr.mxu0 0.0
    %504 = vmatpush1.msra.mxu0 0.0
    %505 = vmatprep.subr.mxu0 0.0
    %506 = vmatpush1.msra.mxu0 0.0
    %507 = vmatprep.subr.mxu0 0.0
    %508 = vmatpush1.msra.mxu0 0.0
    %509 = vmatprep.subr.mxu0 0.0
    %510 = vmatpush1.msra.mxu0 0.0
    %511 = vmatprep.subr.mxu0 0.0
    %512 = vmatpush1.msra.mxu0 0.0
    %513 = vmatprep.subr.mxu0 0.0
    %514 = vmatpush1.msra.mxu0 0.0
    %515 = vmatprep.subr.mxu0 0.0
    %516 = vmatpush1.msra.mxu0 0.0
    %517 = vmatprep.mubr.f32.mxu0 0.0
    %518 = vmatmul.mubr.f32.gmra.mrb[0].mxu0 %v448
    %v519 = vpop.f32.mrb[0].mxu0
    %v520 = vadd.f32 0.0, %v519
    %v521 = vpop.f32.mrb[0].mxu0
    %522 = vmatprep.mubr.f32.mxu0 0.0
    %523 = vmatmul.mubr.f32.gmra.mrb[0].mxu0 %v451
    %v524 = vpop.f32.mrb[0].mxu0
    %v525 = vadd.f32 0.0, %v524
    %v526 = vpop.f32.mrb[0].mxu0
    %527 = vdwg.mxu0
    %v528 = vmax.f32 %v520, 0.0
    %v529 = vmax.f32 %v525, 0.0
    %v530 = vadd.f32 %v445, %v528
    %v531 = vadd.f32 %v446, %v529
    %532 = vst [vmem:[#allocation8] sm:$0xff] %v530
    %533 = vst [vmem:[#allocation8 + $0x8] sm:$0xff] %v531
    %v535 = vsel %vm66, %v271, 0
    %v538 = vsel %vm66, %v272, 0
    %540 = vmatprep.subr.mxu0 0.0
    %541 = vmatpush1.msra.mxu0 %v158
    %542 = vmatprep.subr.mxu0 0.0
    %543 = vmatpush1.msra.mxu0 %v164
    %544 = vmatprep.subr.mxu0 0.0
    %545 = vmatpush1.msra.mxu0 0.0
    %546 = vmatprep.subr.mxu0 0.0
    %547 = vmatpush1.msra.mxu0 0.0
    %548 = vmatprep.subr.mxu0 0.0
    %549 = vmatpush1.msra.mxu0 0.0
    %550 = vmatprep.subr.mxu0 0.0
    %551 = vmatpush1.msra.mxu0 0.0
    %552 = vmatprep.subr.mxu0 0.0
    %553 = vmatpush1.msra.mxu0 0.0
    %554 = vmatprep.subr.mxu0 0.0
    %555 = vmatpush1.msra.mxu0 0.0
    %556 = vmatprep.subr.mxu0 0.0
    %557 = vmatpush1.msra.mxu0 0.0
    %558 = vmatprep.subr.mxu0 0.0
    %559 = vmatpush1.msra.mxu0 0.0
    %560 = vmatprep.subr.mxu0 0.0
    %561 = vmatpush1.msra.mxu0 0.0
    %562 = vmatprep.subr.mxu0 0.0
    %563 = vmatpush1.msra.mxu0 0.0
    %564 = vmatprep.subr.mxu0 0.0
    %565 = vmatpush1.msra.mxu0 0.0
    %566 = vmatprep.subr.mxu0 0.0
    %567 = vmatpush1.msra.mxu0 0.0
    %568 = vmatprep.subr.mxu0 0.0
    %569 = vmatpush1.msra.mxu0 0.0
    %570 = vmatprep.subr.mxu0 0.0
    %571 = vmatpush1.msra.mxu0 0.0
    %572 = vmatprep.subr.mxu0 0.0
    %573 = vmatpush1.msra.mxu0 0.0
    %574 = vmatprep.subr.mxu0 0.0
    %575 = vmatpush1.msra.mxu0 0.0
    %576 = vmatprep.subr.mxu0 0.0
    %577 = vmatpush1.msra.mxu0 0.0
    %578 = vmatprep.subr.mxu0 0.0
    %579 = vmatpush1.msra.mxu0 0.0
    %580 = vmatprep.subr.mxu0 0.0
    %581 = vmatpush1.msra.mxu0 0.0
    %582 = vmatprep.subr.mxu0 0.0
    %583 = vmatpush1.msra.mxu0 0.0
    %584 = vmatprep.subr.mxu0 0.0
    %585 = vmatpush1.msra.mxu0 0.0
    %586 = vmatprep.subr.mxu0 0.0
    %587 = vmatpush1.msra.mxu0 0.0
    %588 = vmatprep.subr.mxu0 0.0
    %589 = vmatpush1.msra.mxu0 0.0
    %590 = vmatprep.subr.mxu0 0.0
    %591 = vmatpush1.msra.mxu0 0.0
    %592 = vmatprep.subr.mxu0 0.0
    %593 = vmatpush1.msra.mxu0 0.0
    %594 = vmatprep.subr.mxu0 0.0
    %595 = vmatpush1.msra.mxu0 0.0
    %596 = vmatprep.subr.mxu0 0.0
    %597 = vmatpush1.msra.mxu0 0.0
    %598 = vmatprep.subr.mxu0 0.0
    %599 = vmatpush1.msra.mxu0 0.0
    %600 = vmatprep.subr.mxu0 0.0
    %601 = vmatpush1.msra.mxu0 0.0
    %602 = vmatprep.subr.mxu0 0.0
    %603 = vmatpush1.msra.mxu0 0.0
    %604 = vmatprep.mubr.f32.mxu0 0.0
    %605 = vmatmul.mubr.f32.gmra.mrb[0].mxu0 %v535
    %v606 = vpop.f32.mrb[0].mxu0
    %v607 = vadd.f32 0.0, %v606
    %v608 = vpop.f32.mrb[0].mxu0
    %609 = vmatprep.mubr.f32.mxu0 0.0
    %610 = vmatmul.mubr.f32.gmra.mrb[0].mxu0 %v538
    %v611 = vpop.f32.mrb[0].mxu0
    %v612 = vadd.f32 0.0, %v611
    %v613 = vpop.f32.mrb[0].mxu0
    %614 = vdwg.mxu0
    %v615 = vmax.f32 %v607, 0.0
    %v616 = vmax.f32 %v612, 0.0
    %v617 = vadd.f32 %v615, 0.0
    %v618 = vadd.f32 %v616, 0.0
    %v620 = vsel %vm66, %v273, 0
    %v623 = vsel %vm66, %v274, 0
    %625 = vmatprep.subr.mxu0 0.0
    %626 = vmatpush1.msra.mxu0 %v160
    %627 = vmatprep.subr.mxu0 0.0
    %628 = vmatpush1.msra.mxu0 %v166
    %629 = vmatprep.subr.mxu0 0.0
    %630 = vmatpush1.msra.mxu0 0.0
    %631 = vmatprep.subr.mxu0 0.0
    %632 = vmatpush1.msra.mxu0 0.0
    %633 = vmatprep.subr.mxu0 0.0
    %634 = vmatpush1.msra.mxu0 0.0
    %635 = vmatprep.subr.mxu0 0.0
    %636 = vmatpush1.msra.mxu0 0.0
    %637 = vmatprep.subr.mxu0 0.0
    %638 = vmatpush1.msra.mxu0 0.0
    %639 = vmatprep.subr.mxu0 0.0
    %640 = vmatpush1.msra.mxu0 0.0
    %641 = vmatprep.subr.mxu0 0.0
    %642 = vmatpush1.msra.mxu0 0.0
    %643 = vmatprep.subr.mxu0 0.0
    %644 = vmatpush1.msra.mxu0 0.0
    %645 = vmatprep.subr.mxu0 0.0
    %646 = vmatpush1.msra.mxu0 0.0
    %647 = vmatprep.subr.mxu0 0.0
    %648 = vmatpush1.msra.mxu0 0.0
    %649 = vmatprep.subr.mxu0 0.0
    %650 = vmatpush1.msra.mxu0 0.0
    %651 = vmatprep.subr.mxu0 0.0
    %652 = vmatpush1.msra.mxu0 0.0
    %653 = vmatprep.subr.mxu0 0.0
    %654 = vmatpush1.msra.mxu0 0.0
    %655 = vmatprep.subr.mxu0 0.0
    %656 = vmatpush1.msra.mxu0 0.0
    %657 = vmatprep.subr.mxu0 0.0
    %658 = vmatpush1.msra.mxu0 0.0
    %659 = vmatprep.subr.mxu0 0.0
    %660 = vmatpush1.msra.mxu0 0.0
    %661 = vmatprep.subr.mxu0 0.0
    %662 = vmatpush1.msra.mxu0 0.0
    %663 = vmatprep.subr.mxu0 0.0
    %664 = vmatpush1.msra.mxu0 0.0
    %665 = vmatprep.subr.mxu0 0.0
    %666 = vmatpush1.msra.mxu0 0.0
    %667 = vmatprep.subr.mxu0 0.0
    %668 = vmatpush1.msra.mxu0 0.0
    %669 = vmatprep.subr.mxu0 0.0
    %670 = vmatpush1.msra.mxu0 0.0
    %671 = vmatprep.subr.mxu0 0.0
    %672 = vmatpush1.msra.mxu0 0.0
    %673 = vmatprep.subr.mxu0 0.0
    %674 = vmatpush1.msra.mxu0 0.0
    %675 = vmatprep.subr.mxu0 0.0
    %676 = vmatpush1.msra.mxu0 0.0
    %677 = vmatprep.subr.mxu0 0.0
    %678 = vmatpush1.msra.mxu0 0.0
    %679 = vmatprep.subr.mxu0 0.0
    %680 = vmatpush1.msra.mxu0 0.0
    %681 = vmatprep.subr.mxu0 0.0
    %682 = vmatpush1.msra.mxu0 0.0
    %683 = vmatprep.subr.mxu0 0.0
    %684 = vmatpush1.msra.mxu0 0.0
    %685 = vmatprep.subr.mxu0 0.0
    %686 = vmatpush1.msra.mxu0 0.0
    %687 = vmatprep.subr.mxu0 0.0
    %688 = vmatpush1.msra.mxu0 0.0
    %689 = vmatprep.mubr.f32.mxu0 0.0
    %690 = vmatmul.mubr.f32.gmra.mrb[0].mxu0 %v620
    %v691 = vpop.f32.mrb[0].mxu0
    %v692 = vadd.f32 0.0, %v691
    %v693 = vpop.f32.mrb[0].mxu0
    %694 = vmatprep.mubr.f32.mxu0 0.0
    %695 = vmatmul.mubr.f32.gmra.mrb[0].mxu0 %v623
    %v696 = vpop.f32.mrb[0].mxu0
    %v697 = vadd.f32 0.0, %v696
    %v698 = vpop.f32.mrb[0].mxu0
    %699 = vdwg.mxu0
    %v700 = vmax.f32 %v692, 0.0
    %v701 = vmax.f32 %v697, 0.0
    %v702 = vadd.f32 %v617, %v700
    %v703 = vadd.f32 %v618, %v701
    %v705 = vsel %vm66, %v275, 0
    %v708 = vsel %vm66, %v276, 0
    %710 = vmatprep.subr.mxu0 0.0
    %711 = vmatpush1.msra.mxu0 %v245
    %712 = vmatprep.subr.mxu0 0.0
    %713 = vmatpush1.msra.mxu0 %v250
    %714 = vmatprep.subr.mxu0 0.0
    %715 = vmatpush1.msra.mxu0 0.0
    %716 = vmatprep.subr.mxu0 0.0
    %717 = vmatpush1.msra.mxu0 0.0
    %718 = vmatprep.subr.mxu0 0.0
    %719 = vmatpush1.msra.mxu0 0.0
    %720 = vmatprep.subr.mxu0 0.0
    %721 = vmatpush1.msra.mxu0 0.0
    %722 = vmatprep.subr.mxu0 0.0
    %723 = vmatpush1.msra.mxu0 0.0
    %724 = vmatprep.subr.mxu0 0.0
    %725 = vmatpush1.msra.mxu0 0.0
    %726 = vmatprep.subr.mxu0 0.0
    %727 = vmatpush1.msra.mxu0 0.0
    %728 = vmatprep.subr.mxu0 0.0
    %729 = vmatpush1.msra.mxu0 0.0
    %730 = vmatprep.subr.mxu0 0.0
    %731 = vmatpush1.msra.mxu0 0.0
    %732 = vmatprep.subr.mxu0 0.0
    %733 = vmatpush1.msra.mxu0 0.0
    %734 = vmatprep.subr.mxu0 0.0
    %735 = vmatpush1.msra.mxu0 0.0
    %736 = vmatprep.subr.mxu0 0.0
    %737 = vmatpush1.msra.mxu0 0.0
    %738 = vmatprep.subr.mxu0 0.0
    %739 = vmatpush1.msra.mxu0 0.0
    %740 = vmatprep.subr.mxu0 0.0
    %741 = vmatpush1.msra.mxu0 0.0
    %742 = vmatprep.subr.mxu0 0.0
    %743 = vmatpush1.msra.mxu0 0.0
    %744 = vmatprep.subr.mxu0 0.0
    %745 = vmatpush1.msra.mxu0 0.0
    %746 = vmatprep.subr.mxu0 0.0
    %747 = vmatpush1.msra.mxu0 0.0
    %748 = vmatprep.subr.mxu0 0.0
    %749 = vmatpush1.msra.mxu0 0.0
    %750 = vmatprep.subr.mxu0 0.0
    %751 = vmatpush1.msra.mxu0 0.0
    %752 = vmatprep.subr.mxu0 0.0
    %753 = vmatpush1.msra.mxu0 0.0
    %754 = vmatprep.subr.mxu0 0.0
    %755 = vmatpush1.msra.mxu0 0.0
    %756 = vmatprep.subr.mxu0 0.0
    %757 = vmatpush1.msra.mxu0 0.0
    %758 = vmatprep.subr.mxu0 0.0
    %759 = vmatpush1.msra.mxu0 0.0
    %760 = vmatprep.subr.mxu0 0.0
    %761 = vmatpush1.msra.mxu0 0.0
    %762 = vmatprep.subr.mxu0 0.0
    %763 = vmatpush1.msra.mxu0 0.0
    %764 = vmatprep.subr.mxu0 0.0
    %765 = vmatpush1.msra.mxu0 0.0
    %766 = vmatprep.subr.mxu0 0.0
    %767 = vmatpush1.msra.mxu0 0.0
    %768 = vmatprep.subr.mxu0 0.0
    %769 = vmatpush1.msra.mxu0 0.0
    %770 = vmatprep.subr.mxu0 0.0
    %771 = vmatpush1.msra.mxu0 0.0
    %772 = vmatprep.subr.mxu0 0.0
    %773 = vmatpush1.msra.mxu0 0.0
    %774 = vmatprep.mubr.f32.mxu0 0.0
    %775 = vmatmul.mubr.f32.gmra.mrb[0].mxu0 %v705
    %v776 = vpop.f32.mrb[0].mxu0
    %v777 = vadd.f32 0.0, %v776
    %v778 = vpop.f32.mrb[0].mxu0
    %779 = vmatprep.mubr.f32.mxu0 0.0
    %780 = vmatmul.mubr.f32.gmra.mrb[0].mxu0 %v708
    %v781 = vpop.f32.mrb[0].mxu0
    %v782 = vadd.f32 0.0, %v781
    %v783 = vpop.f32.mrb[0].mxu0
    %784 = vdwg.mxu0
    %v785 = vmax.f32 %v777, 0.0
    %v786 = vmax.f32 %v782, 0.0
    %v787 = vadd.f32 %v702, %v785
    %v788 = vadd.f32 %v703, %v786
    %s789 = scalar_lea.vmem [#allocation8], 16
    %790 = vst [vmem:[%s789] sm:$0xff] %v787
    %791 = vst [vmem:[%s789 + $0x8] sm:$0xff] %v788
    // Predicated region
    $region26: #{tpu_custom_call.1} parent=1 // pred_check
      _
    $region27: #{tpu_custom_call.1} parent=1 // pred_check_branch
      %793 = sbr.rel (0) target = $region29
    $region28: #{tpu_custom_call.1} parent=1 // pred_region
      %s795 = ssub.s32 512, 512
      %796 = vsyncadd [#allocation4], %s795
      %s797 = sshll.u32 [#allocation8], 4
      %s798 = int_to_ptr.vmem [resolvable:$true] %s797
      %803 = dma.vmem_to_hbm [thread:$0]  %s798, 512, %s3, [#allocation4], 128, 128, 8
    $region29: #{tpu_custom_call.1} parent=1 // pred_fallthru
      _
    // Predicated region
    $region30: #{tpu_custom_call.1} parent=1 // pred_check
      _
    $region31: #{tpu_custom_call.1} parent=1 // pred_check_branch
      %805 = sbr.rel (0) target = $region33
    $region32: #{tpu_custom_call.1} parent=1 // pred_region
      %806 = dma.done [#allocation4], 512
    $region33: #{tpu_custom_call.1} parent=1 // pred_fallthru
      _
    %807 = vsyncpa [#allocation3], 1
    %808 = vsyncpa [#allocation6], 1
    %809 = vsyncpa [#allocation4], 1

</llo_original>
